<compile_context>
chip_gen: v5e
topology: v5e:2x2
jax: 0.10.0
libtpu: 0.0.40
codegen_flags: <defaults>
</compile_context>

<pallas_src>
import functools

import jax
import jax.numpy as jnp
from jax.experimental import pallas as pl
from jax.experimental.pallas import tpu as pltpu


def _upscale2d_kernel(rep_ref, x_ref, o_ref, *, factor, gain):
    # rep_ref: (W, W*factor) bf16 0/1 replication matrix (resident in VMEM).
    # x_ref:   (rows_tile, W) input rows.
    # o_ref:   (rows_tile, factor*W*factor) flattened output rows.
    w = x_ref.shape[-1]
    wf = w * factor
    rep = rep_ref[...]

    if x_ref.dtype == jnp.bfloat16 and gain == 1:
        # bf16 values are exact MXU operands: one pass, bit-exact.
        parts = (x_ref[...],)
    else:
        xf = x_ref[...].astype(jnp.float32)
        if gain != 1:
            xf = xf * jnp.float32(gain)
        # Exact f32 -> 3 x bf16 split (disjoint bit fields via truncation), so
        # each bf16 x bf16 -> f32 MXU pass is exact and the partial sums add
        # back to the original f32 value exactly.
        bits = pltpu.bitcast(xf, jnp.uint32)
        hi = pltpu.bitcast(bits & jnp.uint32(0xFFFF0000), jnp.float32)
        r1 = xf - hi
        r1b = pltpu.bitcast(r1, jnp.uint32)
        mid = pltpu.bitcast(r1b & jnp.uint32(0xFFFF0000), jnp.float32)
        lo = r1 - mid
        parts = (hi.astype(jnp.bfloat16),
                 mid.astype(jnp.bfloat16),
                 lo.astype(jnp.bfloat16))

    # Lane (W) replication on the MXU: y[r, w*f + j] = x[r, w].
    y = None
    for p in parts:  # 1 or 3 exact MXU passes
        t = jnp.dot(p, rep, preferred_element_type=jnp.float32)
        y = t if y is None else y + t
    yc = y.astype(o_ref.dtype)  # (rows_tile, W*factor)

    # H replication: `factor` dense copies along the lane axis of the
    # flattened (R, factor*W*factor) output view.
    for i in range(factor):
        o_ref[:, i * wf:(i + 1) * wf] = yc


def _row_tile(rows, out_cols, itemsize, target_bytes=4 << 20):
    """Pick a row tile targeting ~4 MiB output blocks, 8-aligned sublanes."""
    rt = target_bytes // max(1, out_cols * itemsize)
    rt = int(min(rows, max(8, (rt // 8) * 8)))
    return rt


def upscale2d(x, factor=2, gain=1):
    """Nearest-neighbour upscale of an NCHW tensor by `factor`, times `gain`."""
    assert x.ndim == 4
    assert isinstance(factor, int) and factor >= 1
    if factor == 1 and gain == 1:
        return x

    n, c, h, w = x.shape
    rows = n * c * h
    out_cols = factor * w * factor

    # Free views only -- no transposes, single HBM read + single HBM write.
    x2 = x.reshape(rows, w)
    # 0/1 replication matrix: rep[w, w*factor + j] = 1.
    rep = jnp.repeat(jnp.eye(w, dtype=jnp.bfloat16), factor, axis=1)

    itemsize = jnp.dtype(x.dtype).itemsize
    rt = _row_tile(rows, out_cols, itemsize)
    grid = (pl.cdiv(rows, rt),)

    kernel = functools.partial(_upscale2d_kernel, factor=factor, gain=gain)

    out2 = pl.pallas_call(
        kernel,
        out_shape=jax.ShapeDtypeStruct((rows, out_cols), x.dtype),
        grid_spec=pltpu.PrefetchScalarGridSpec(
            num_scalar_prefetch=0,
            grid=grid,
            in_specs=[
                # Replication matrix: constant block index -> fetched once.
                pl.BlockSpec((w, w * factor), lambda i: (0, 0)),
                pl.BlockSpec((rt, w), lambda i: (i, 0)),
            ],
            out_specs=pl.BlockSpec((rt, out_cols), lambda i: (i, 0)),
        ),
        compiler_params=pltpu.CompilerParams(
            dimension_semantics=("parallel",),      # sharded across v7x's 2 TCs
            vmem_limit_bytes=32 * 1024 * 1024,      # safe on v5e/v6e/v7x
        ),
    )(rep, x2)

    return out2.reshape(n, c, h * factor, w * factor)


class Upscale2d:
    """Forward-only equivalent of the PyTorch Upscale2d module."""

    def __init__(self, factor=2, gain=1):
        assert isinstance(factor, int) and factor >= 1
        self.factor = factor
        self.gain = gain

    def __call__(self, x):
        return upscale2d(x, factor=self.factor, gain=self.gain)


if __name__ == "__main__":
    key = jax.random.PRNGKey(0)
    x = jax.random.normal(key, (2, 4, 16, 16), dtype=jnp.float32)

    # Primary check: module defaults (factor=2, gain=1), float32 input.
    out = jax.block_until_ready(Upscale2d(factor=2, gain=1)(x))
    ref = jnp.repeat(jnp.repeat(x, 2, axis=2), 2, axis=3)
    assert out.shape == (2, 4, 32, 32) and out.dtype == x.dtype
    assert jnp.allclose(out, ref, atol=1e-6, rtol=1e-6)

    # bf16 input exercises the single-pass fast path (halves HBM traffic).
    xb = x.astype(jnp.bfloat16)
    outb = jax.block_until_ready(upscale2d(xb, factor=2, gain=1))
    refb = jnp.repeat(jnp.repeat(xb, 2, axis=2), 2, axis=3)
    assert outb.dtype == jnp.bfloat16
    assert jnp.allclose(outb.astype(jnp.float32), refb.astype(jnp.float32),
                        atol=1e-6, rtol=1e-6)

    # Non-unit gain path.
    outg = jax.block_until_ready(upscale2d(x, factor=2, gain=2.0))
    assert jnp.allclose(outg, 2.0 * ref, atol=1e-5, rtol=1e-6)

    print("KERNEL_OK")
</pallas_src>

<mosaic_0001>
module attributes {stable_mosaic.version = 11 : i64} {
  func.func @_upscale2d_kernel(%arg0: i32, %arg1: memref<16x32xbf16, #tpu.memory_space<vmem>>, %arg2: memref<128x16xf32, #tpu.memory_space<vmem>>, %arg3: memref<128x64xf32, #tpu.memory_space<vmem>>) attributes {dimension_semantics = [#tpu.dimension_semantics<parallel>], iteration_bounds = array<i64: 1>, scalar_prefetch = 0 : i64, scratch_operands = 0 : i64, tpu.core_type = #tpu.core_type<tc>, window_params = [{pipeline_mode = #tpu.pipeline_mode<synchronous>, transform_indices = @transform_0, window_bounds = array<i64: 16, 32>}, {transform_indices = @transform_1, window_bounds = array<i64: 128, 16>}, {transform_indices = @transform_2, window_bounds = array<i64: 128, 64>}]} {
    %c0 = arith.constant 0 : index
    %c0_0 = arith.constant 0 : index
    %0 = vector.load %arg1[%c0, %c0_0] : memref<16x32xbf16, #tpu.memory_space<vmem>>, vector<16x32xbf16>
    %c0_1 = arith.constant 0 : index
    %c0_2 = arith.constant 0 : index
    %1 = vector.load %arg2[%c0_1, %c0_2] : memref<128x16xf32, #tpu.memory_space<vmem>>, vector<128x16xf32>
    %2 = tpu.bitcast %1 : vector<128x16xf32> -> vector<128x16xi32>
    %c-65536_i32 = arith.constant -65536 : i32
    %3 = vector.broadcast %c-65536_i32 : i32 to vector<128x16xi32>
    %4 = arith.andi %2, %3 : vector<128x16xi32>
    %5 = tpu.bitcast %4 : vector<128x16xi32> -> vector<128x16xf32>
    %6 = arith.subf %1, %5 : vector<128x16xf32>
    %7 = tpu.bitcast %6 : vector<128x16xf32> -> vector<128x16xi32>
    %c-65536_i32_3 = arith.constant -65536 : i32
    %8 = vector.broadcast %c-65536_i32_3 : i32 to vector<128x16xi32>
    %9 = arith.andi %7, %8 : vector<128x16xi32>
    %10 = tpu.bitcast %9 : vector<128x16xi32> -> vector<128x16xf32>
    %11 = arith.subf %6, %10 : vector<128x16xf32>
    %12 = arith.truncf %5 : vector<128x16xf32> to vector<128x16xbf16>
    %13 = arith.truncf %10 : vector<128x16xf32> to vector<128x16xbf16>
    %14 = arith.truncf %11 : vector<128x16xf32> to vector<128x16xbf16>
    %cst = arith.constant dense<0.000000e+00> : vector<128x32xf32>
    %15 = tpu.matmul %12, %0, %cst {dimension_numbers = #tpu.dot_dimension_numbers<[1], [0], [0], [1], [0, 0, 1, 1], [], []>} : vector<128x16xbf16>, vector<16x32xbf16>, vector<128x32xf32> -> vector<128x32xf32>
    %cst_4 = arith.constant dense<0.000000e+00> : vector<128x32xf32>
    %16 = tpu.matmul %13, %0, %cst_4 {dimension_numbers = #tpu.dot_dimension_numbers<[1], [0], [0], [1], [0, 0, 1, 1], [], []>} : vector<128x16xbf16>, vector<16x32xbf16>, vector<128x32xf32> -> vector<128x32xf32>
    %17 = arith.addf %15, %16 : vector<128x32xf32>
    %cst_5 = arith.constant dense<0.000000e+00> : vector<128x32xf32>
    %18 = tpu.matmul %14, %0, %cst_5 {dimension_numbers = #tpu.dot_dimension_numbers<[1], [0], [0], [1], [0, 0, 1, 1], [], []>} : vector<128x16xbf16>, vector<16x32xbf16>, vector<128x32xf32> -> vector<128x32xf32>
    %19 = arith.addf %17, %18 : vector<128x32xf32>
    %c0_6 = arith.constant 0 : index
    %c0_7 = arith.constant 0 : index
    %20 = vector.load %arg3[%c0_6, %c0_7] : memref<128x64xf32, #tpu.memory_space<vmem>>, vector<128x32xf32>
    tpu.vector_store %arg3[%c0_6, %c0_7], %19 {strides = array<i32>} : memref<128x64xf32, #tpu.memory_space<vmem>>, vector<128x32xf32>,
    %c0_8 = arith.constant 0 : index
    %c32 = arith.constant 32 : index
    %21 = vector.load %arg3[%c0_8, %c32] : memref<128x64xf32, #tpu.memory_space<vmem>>, vector<128x32xf32>
    tpu.vector_store %arg3[%c0_8, %c32], %19 {strides = array<i32>} : memref<128x64xf32, #tpu.memory_space<vmem>>, vector<128x32xf32>,
    return
  }
  func.func @transform_0(%arg0: i32) -> (i32, i32) {
    %c0_i32 = arith.constant 0 : i32
    %c0_i32_0 = arith.constant 0 : i32
    %c0_i32_1 = arith.constant 0 : i32
    return %c0_i32, %c0_i32_0 : i32, i32
  }
  func.func @transform_1(%arg0: i32) -> (i32, i32) {
    %c0_i32 = arith.constant 0 : i32
    %c0_i32_0 = arith.constant 0 : i32
    return %arg0, %c0_i32 : i32, i32
  }
  func.func @transform_2(%arg0: i32) -> (i32, i32) {
    %c0_i32 = arith.constant 0 : i32
    %c0_i32_0 = arith.constant 0 : i32
    return %arg0, %c0_i32 : i32, i32
  }
}

</mosaic_0001>

<llo_original>
// kernel: tpu_custom_call.1
$region0: #{tpu_custom_call.1}
  #allocation0 [shape = 'u32[]', space=smem, size = 0x4, offset = 0x4, fixed_abs, tag = 'smem constant byte address 0x4 - core index']
  #allocation1 [shape = 'u32[72,128]{1,0:T(1,128)}', space=vmem, size = 0x9000, scoped, tag = 'internal scratch']
  %s0 = inlined_call_operand.vmem [shape: bf16[16,32], index: 0, kind: input, shape index: {}]
  %s1 = inlined_call_operand.vmem [shape: f32[128,16], index: 1, kind: input, shape index: {}]
  %s2 = inlined_call_operand.vmem [shape: f32[128,64], index: 2, kind: output, shape index: {}]
  %s3 = sld [smem:[#allocation0]]
  $region18: #{tpu_custom_call.1} parent=0
    _
  %s5 = ssub.s32 1, %s3
  %s6 = scalar_select 0, %s5, %s3
  // Predicated region
  $region2: #{tpu_custom_call.1} parent=0 // pred_check
    _
  $region3: #{tpu_custom_call.1} parent=0 // pred_check_branch
    %8 = sbr.rel (0) target = $region5
  $region4: #{tpu_custom_call.1} parent=0 // pred_region
    _
  $region5: #{tpu_custom_call.1} parent=0 // pred_fallthru
    _
  // Predicated region
  $region6: #{tpu_custom_call.1} parent=0 // pred_check
    _
  $region7: #{tpu_custom_call.1} parent=0 // pred_check_branch
    %10 = sbr.rel (0) target = $region9
  $region8: #{tpu_custom_call.1} parent=0 // pred_region
    _
  $region9: #{tpu_custom_call.1} parent=0 // pred_fallthru
    _
  %v12 = vld [vmem:[%s0] sm:$0xf]
  %v13 = vld [vmem:[%s0 + $0x4] sm:$0xf]
  %v14 = vld [vmem:[%s1] sm:$0xff]
  %v15 = vld [vmem:[%s1 + $0x8] sm:$0xff]
  %v16 = vld [vmem:[%s1 + $0x10] sm:$0xff]
  %v17 = vld [vmem:[%s1 + $0x18] sm:$0xff]
  %v18 = vld [vmem:[%s1 + $0x20] sm:$0xff]
  %v19 = vld [vmem:[%s1 + $0x28] sm:$0xff]
  %v20 = vld [vmem:[%s1 + $0x30] sm:$0xff]
  %v21 = vld [vmem:[%s1 + $0x38] sm:$0xff]
  %v22 = vld [vmem:[%s1 + $0x40] sm:$0xff]
  %v23 = vld [vmem:[%s1 + $0x48] sm:$0xff]
  %v24 = vld [vmem:[%s1 + $0x50] sm:$0xff]
  %v25 = vld [vmem:[%s1 + $0x58] sm:$0xff]
  %v26 = vld [vmem:[%s1 + $0x60] sm:$0xff]
  %v27 = vld [vmem:[%s1 + $0x68] sm:$0xff]
  %v28 = vld [vmem:[%s1 + $0x70] sm:$0xff]
  %v29 = vld [vmem:[%s1 + $0x78] sm:$0xff]
  %v46 = vand.u32 %v14, 4294901760
  %v47 = vand.u32 %v15, 4294901760
  %v48 = vand.u32 %v16, 4294901760
  %v49 = vand.u32 %v17, 4294901760
  %v50 = vand.u32 %v18, 4294901760
  %v51 = vand.u32 %v19, 4294901760
  %v52 = vand.u32 %v20, 4294901760
  %v53 = vand.u32 %v21, 4294901760
  %v54 = vand.u32 %v22, 4294901760
  %v55 = vand.u32 %v23, 4294901760
  %v56 = vand.u32 %v24, 4294901760
  %v57 = vand.u32 %v25, 4294901760
  %v58 = vand.u32 %v26, 4294901760
  %v59 = vand.u32 %v27, 4294901760
  %v60 = vand.u32 %v28, 4294901760
  %v61 = vand.u32 %v29, 4294901760
  %v78 = vsub.f32 %v14, %v46
  %v79 = vsub.f32 %v15, %v47
  %v80 = vsub.f32 %v16, %v48
  %v81 = vsub.f32 %v17, %v49
  %v82 = vsub.f32 %v18, %v50
  %v83 = vsub.f32 %v19, %v51
  %v84 = vsub.f32 %v20, %v52
  %v85 = vsub.f32 %v21, %v53
  %v86 = vsub.f32 %v22, %v54
  %v87 = vsub.f32 %v23, %v55
  %v88 = vsub.f32 %v24, %v56
  %v89 = vsub.f32 %v25, %v57
  %v90 = vsub.f32 %v26, %v58
  %v91 = vsub.f32 %v27, %v59
  %v92 = vsub.f32 %v28, %v60
  %v93 = vsub.f32 %v29, %v61
  %v110 = vand.u32 %v78, 4294901760
  %v111 = vand.u32 %v79, 4294901760
  %v112 = vand.u32 %v80, 4294901760
  %v113 = vand.u32 %v81, 4294901760
  %v114 = vand.u32 %v82, 4294901760
  %v115 = vand.u32 %v83, 4294901760
  %v116 = vand.u32 %v84, 4294901760
  %v117 = vand.u32 %v85, 4294901760
  %v118 = vand.u32 %v86, 4294901760
  %v119 = vand.u32 %v87, 4294901760
  %v120 = vand.u32 %v88, 4294901760
  %v121 = vand.u32 %v89, 4294901760
  %v122 = vand.u32 %v90, 4294901760
  %v123 = vand.u32 %v91, 4294901760
  %v124 = vand.u32 %v92, 4294901760
  %v125 = vand.u32 %v93, 4294901760
  %v142 = vsub.f32 %v78, %v110
  %v143 = vsub.f32 %v79, %v111
  %v144 = vsub.f32 %v80, %v112
  %v145 = vsub.f32 %v81, %v113
  %v146 = vsub.f32 %v82, %v114
  %v147 = vsub.f32 %v83, %v115
  %v148 = vsub.f32 %v84, %v116
  %v149 = vsub.f32 %v85, %v117
  %v150 = vsub.f32 %v86, %v118
  %v151 = vsub.f32 %v87, %v119
  %v152 = vsub.f32 %v88, %v120
  %v153 = vsub.f32 %v89, %v121
  %v154 = vsub.f32 %v90, %v122
  %v155 = vsub.f32 %v91, %v123
  %v156 = vsub.f32 %v92, %v124
  %v157 = vsub.f32 %v93, %v125
  %v158 = vpack.c.bf16 %v47, %v46
  %v159 = vpack.c.bf16 %v49, %v48
  %v160 = vpack.c.bf16 %v51, %v50
  %v161 = vpack.c.bf16 %v53, %v52
  %v162 = vpack.c.bf16 %v55, %v54
  %v163 = vpack.c.bf16 %v57, %v56
  %v164 = vpack.c.bf16 %v59, %v58
  %v165 = vpack.c.bf16 %v61, %v60
  %v166 = vpack.c.bf16 %v111, %v110
  %v167 = vpack.c.bf16 %v113, %v112
  %v168 = vpack.c.bf16 %v115, %v114
  %v169 = vpack.c.bf16 %v117, %v116
  %v170 = vpack.c.bf16 %v119, %v118
  %v171 = vpack.c.bf16 %v121, %v120
  %v172 = vpack.c.bf16 %v123, %v122
  %v173 = vpack.c.bf16 %v125, %v124
  %v174 = vpack.c.bf16 %v143, %v142
  %v175 = vpack.c.bf16 %v145, %v144
  %v176 = vpack.c.bf16 %v147, %v146
  %v177 = vpack.c.bf16 %v149, %v148
  %v178 = vpack.c.bf16 %v151, %v150
  %v179 = vpack.c.bf16 %v153, %v152
  %v180 = vpack.c.bf16 %v155, %v154
  %v181 = vpack.c.bf16 %v157, %v156
  %v184 = vunpack.c.l.b16 %v12
  %v185 = vunpack.c.l.b16 %v13
  %v186 = vpack.c.b16 %v185, %v184
  %vm188 = vcmask 130048
  %v190 = vsel %vm188, %v166, 0
  %v193 = vsel %vm188, %v167, 0
  %v196 = vsel %vm188, %v168, 0
  %v199 = vsel %vm188, %v169, 0
  %v202 = vsel %vm188, %v170, 0
  %v205 = vsel %vm188, %v171, 0
  %v208 = vsel %vm188, %v172, 0
  %v211 = vsel %vm188, %v173, 0
  %213 = vmatpush.bf16.msra.mxu0 0
  %214 = vmatpush.bf16.msra.mxu0 0
  %215 = vmatpush.bf16.msra.mxu0 0
  %216 = vmatpush.bf16.msra.mxu0 0
  %217 = vmatpush.bf16.msra.mxu0 0
  %218 = vmatpush.bf16.msra.mxu0 0
  %219 = vmatpush.bf16.msra.mxu0 0
  %220 = vmatpush.bf16.msra.mxu0 %v186
  %221 = vmatmul.bf16.gmra.mxu0 %v190
  %v222 = vpop.f32.mrf.mxu0
  %v223 = vadd.f32 0.0, %v222
  %v224 = vpop.f32.mrf.mxu0
  %v225 = vadd.f32 0.0, %v224
  %226 = vmatmul.bf16.gmra.mxu0 %v193
  %v227 = vpop.f32.mrf.mxu0
  %v228 = vadd.f32 0.0, %v227
  %v229 = vpop.f32.mrf.mxu0
  %v230 = vadd.f32 0.0, %v229
  %231 = vmatmul.bf16.gmra.mxu0 %v196
  %v232 = vpop.f32.mrf.mxu0
  %v233 = vadd.f32 0.0, %v232
  %v234 = vpop.f32.mrf.mxu0
  %v235 = vadd.f32 0.0, %v234
  %236 = vmatmul.bf16.gmra.mxu0 %v199
  %v237 = vpop.f32.mrf.mxu0
  %v238 = vadd.f32 0.0, %v237
  %v239 = vpop.f32.mrf.mxu0
  %v240 = vadd.f32 0.0, %v239
  %241 = vmatmul.bf16.gmra.mxu0 %v202
  %v242 = vpop.f32.mrf.mxu0
  %v243 = vadd.f32 0.0, %v242
  %v244 = vpop.f32.mrf.mxu0
  %v245 = vadd.f32 0.0, %v244
  %246 = vmatmul.bf16.gmra.mxu0 %v205
  %v247 = vpop.f32.mrf.mxu0
  %v248 = vadd.f32 0.0, %v247
  %v249 = vpop.f32.mrf.mxu0
  %v250 = vadd.f32 0.0, %v249
  %251 = vmatmul.bf16.gmra.mxu0 %v208
  %v252 = vpop.f32.mrf.mxu0
  %v253 = vadd.f32 0.0, %v252
  %v254 = vpop.f32.mrf.mxu0
  %v255 = vadd.f32 0.0, %v254
  %256 = vmatmul.bf16.gmra.mxu0 %v211
  %v257 = vpop.f32.mrf.mxu0
  %v258 = vadd.f32 0.0, %v257
  %v259 = vpop.f32.mrf.mxu0
  %v260 = vadd.f32 0.0, %v259
  %261 = vdwg.mxu0
  %v263 = vsel %vm188, %v158, 0
  %v266 = vsel %vm188, %v159, 0
  %v269 = vsel %vm188, %v160, 0
  %v272 = vsel %vm188, %v161, 0
  %v275 = vsel %vm188, %v162, 0
  %v278 = vsel %vm188, %v163, 0
  %v281 = vsel %vm188, %v164, 0
  %v284 = vsel %vm188, %v165, 0
  %286 = vmatpush.bf16.msra.mxu0 0
  %287 = vmatpush.bf16.msra.mxu0 0
  %288 = vmatpush.bf16.msra.mxu0 0
  %289 = vmatpush.bf16.msra.mxu0 0
  %290 = vmatpush.bf16.msra.mxu0 0
  %291 = vmatpush.bf16.msra.mxu0 0
  %292 = vmatpush.bf16.msra.mxu0 0
  %293 = vmatpush.bf16.msra.mxu0 %v186
  %294 = vmatmul.bf16.gmra.mxu0 %v263
  %v295 = vpop.f32.mrf.mxu0
  %v296 = vadd.f32 %v223, %v295
  %v297 = vpop.f32.mrf.mxu0
  %v298 = vadd.f32 %v225, %v297
  %299 = vmatmul.bf16.gmra.mxu0 %v266
  %v300 = vpop.f32.mrf.mxu0
  %v301 = vadd.f32 %v228, %v300
  %v302 = vpop.f32.mrf.mxu0
  %v303 = vadd.f32 %v230, %v302
  %304 = vmatmul.bf16.gmra.mxu0 %v269
  %v305 = vpop.f32.mrf.mxu0
  %v306 = vadd.f32 %v233, %v305
  %v307 = vpop.f32.mrf.mxu0
  %v308 = vadd.f32 %v235, %v307
  %309 = vmatmul.bf16.gmra.mxu0 %v272
  %v310 = vpop.f32.mrf.mxu0
  %v311 = vadd.f32 %v238, %v310
  %v312 = vpop.f32.mrf.mxu0
  %v313 = vadd.f32 %v240, %v312
  %314 = vmatmul.bf16.gmra.mxu0 %v275
  %v315 = vpop.f32.mrf.mxu0
  %v316 = vadd.f32 %v243, %v315
  %v317 = vpop.f32.mrf.mxu0
  %v318 = vadd.f32 %v245, %v317
  %319 = vmatmul.bf16.gmra.mxu0 %v278
  %v320 = vpop.f32.mrf.mxu0
  %v321 = vadd.f32 %v248, %v320
  %v322 = vpop.f32.mrf.mxu0
  %v323 = vadd.f32 %v250, %v322
  %324 = vmatmul.bf16.gmra.mxu0 %v281
  %v325 = vpop.f32.mrf.mxu0
  %v326 = vadd.f32 %v253, %v325
  %v327 = vpop.f32.mrf.mxu0
  %v328 = vadd.f32 %v255, %v327
  %329 = vmatmul.bf16.gmra.mxu0 %v284
  %v330 = vpop.f32.mrf.mxu0
  %v331 = vadd.f32 %v258, %v330
  %v332 = vpop.f32.mrf.mxu0
  %v333 = vadd.f32 %v260, %v332
  %334 = vdwg.mxu0
  %v336 = vsel %vm188, %v174, 0
  %v339 = vsel %vm188, %v175, 0
  %v342 = vsel %vm188, %v176, 0
  %v345 = vsel %vm188, %v177, 0
  %v348 = vsel %vm188, %v178, 0
  %v351 = vsel %vm188, %v179, 0
  %v354 = vsel %vm188, %v180, 0
  %v357 = vsel %vm188, %v181, 0
  %359 = vmatpush.bf16.msra.mxu0 0
  %360 = vmatpush.bf16.msra.mxu0 0
  %361 = vmatpush.bf16.msra.mxu0 0
  %362 = vmatpush.bf16.msra.mxu0 0
  %363 = vmatpush.bf16.msra.mxu0 0
  %364 = vmatpush.bf16.msra.mxu0 0
  %365 = vmatpush.bf16.msra.mxu0 0
  %366 = vmatpush.bf16.msra.mxu0 %v186
  %367 = vmatmul.bf16.gmra.mxu0 %v336
  %v368 = vpop.f32.mrf.mxu0
  %v369 = vadd.f32 0.0, %v368
  %v370 = vpop.f32.mrf.mxu0
  %v371 = vadd.f32 0.0, %v370
  %372 = vmatmul.bf16.gmra.mxu0 %v339
  %v373 = vpop.f32.mrf.mxu0
  %v374 = vadd.f32 0.0, %v373
  %v375 = vpop.f32.mrf.mxu0
  %v376 = vadd.f32 0.0, %v375
  %377 = vmatmul.bf16.gmra.mxu0 %v342
  %v378 = vpop.f32.mrf.mxu0
  %v379 = vadd.f32 0.0, %v378
  %v380 = vpop.f32.mrf.mxu0
  %v381 = vadd.f32 0.0, %v380
  %382 = vmatmul.bf16.gmra.mxu0 %v345
  %v383 = vpop.f32.mrf.mxu0
  %v384 = vadd.f32 0.0, %v383
  %v385 = vpop.f32.mrf.mxu0
  %v386 = vadd.f32 0.0, %v385
  %387 = vmatmul.bf16.gmra.mxu0 %v348
  %v388 = vpop.f32.mrf.mxu0
  %v389 = vadd.f32 0.0, %v388
  %v390 = vpop.f32.mrf.mxu0
  %v391 = vadd.f32 0.0, %v390
  %392 = vmatmul.bf16.gmra.mxu0 %v351
  %v393 = vpop.f32.mrf.mxu0
  %v394 = vadd.f32 0.0, %v393
  %v395 = vpop.f32.mrf.mxu0
  %v396 = vadd.f32 0.0, %v395
  %397 = vmatmul.bf16.gmra.mxu0 %v354
  %v398 = vpop.f32.mrf.mxu0
  %v399 = vadd.f32 0.0, %v398
  %v400 = vpop.f32.mrf.mxu0
  %v401 = vadd.f32 0.0, %v400
  %402 = vmatmul.bf16.gmra.mxu0 %v357
  %v403 = vpop.f32.mrf.mxu0
  %v404 = vadd.f32 0.0, %v403
  %v405 = vpop.f32.mrf.mxu0
  %v406 = vadd.f32 0.0, %v405
  %407 = vdwg.mxu0
  %v408 = vadd.f32 %v296, %v369
  %v409 = vadd.f32 %v298, %v371
  %v410 = vadd.f32 %v301, %v374
  %v411 = vadd.f32 %v303, %v376
  %v412 = vadd.f32 %v306, %v379
  %v413 = vadd.f32 %v308, %v381
  %v414 = vadd.f32 %v311, %v384
  %v415 = vadd.f32 %v313, %v386
  %v416 = vadd.f32 %v316, %v389
  %v417 = vadd.f32 %v318, %v391
  %v418 = vadd.f32 %v321, %v394
  %v419 = vadd.f32 %v323, %v396
  %v420 = vadd.f32 %v326, %v399
  %v421 = vadd.f32 %v328, %v401
  %v422 = vadd.f32 %v331, %v404
  %v423 = vadd.f32 %v333, %v406
  %vm424 = vcmask 261120
  %425 = vst.msk [vmem:[%s2] sm:$0xff] %vm424, %v408
  %426 = vst.msk [vmem:[%s2 + $0x8] sm:$0xff] %vm424, %v409
  %427 = vst.msk [vmem:[%s2 + $0x10] sm:$0xff] %vm424, %v410
  %428 = vst.msk [vmem:[%s2 + $0x18] sm:$0xff] %vm424, %v411
  %429 = vst.msk [vmem:[%s2 + $0x20] sm:$0xff] %vm424, %v412
  %430 = vst.msk [vmem:[%s2 + $0x28] sm:$0xff] %vm424, %v413
  %431 = vst.msk [vmem:[%s2 + $0x30] sm:$0xff] %vm424, %v414
  %432 = vst.msk [vmem:[%s2 + $0x38] sm:$0xff] %vm424, %v415
  %433 = vst.msk [vmem:[%s2 + $0x40] sm:$0xff] %vm424, %v416
  %434 = vst.msk [vmem:[%s2 + $0x48] sm:$0xff] %vm424, %v417
  %435 = vst.msk [vmem:[%s2 + $0x50] sm:$0xff] %vm424, %v418
  %436 = vst.msk [vmem:[%s2 + $0x58] sm:$0xff] %vm424, %v419
  %437 = vst.msk [vmem:[%s2 + $0x60] sm:$0xff] %vm424, %v420
  %438 = vst.msk [vmem:[%s2 + $0x68] sm:$0xff] %vm424, %v421
  %439 = vst.msk [vmem:[%s2 + $0x70] sm:$0xff] %vm424, %v422
  %440 = vst.msk [vmem:[%s2 + $0x78] sm:$0xff] %vm424, %v423
  %457 = vrot.lane.b32.xlu0 %v408, 32
  %v458 = vpop.permute.xlu0 %457
  %459 = vrot.lane.b32.xlu0 %v409, 32
  %v460 = vpop.permute.xlu0 %459
  %461 = vrot.lane.b32.xlu0 %v410, 32
  %v462 = vpop.permute.xlu0 %461
  %463 = vrot.lane.b32.xlu0 %v411, 32
  %v464 = vpop.permute.xlu0 %463
  %465 = vrot.lane.b32.xlu0 %v412, 32
  %v466 = vpop.permute.xlu0 %465
  %467 = vrot.lane.b32.xlu0 %v413, 32
  %v468 = vpop.permute.xlu0 %467
  %469 = vrot.lane.b32.xlu0 %v414, 32
  %v470 = vpop.permute.xlu0 %469
  %471 = vrot.lane.b32.xlu0 %v415, 32
  %v472 = vpop.permute.xlu0 %471
  %473 = vrot.lane.b32.xlu0 %v416, 32
  %v474 = vpop.permute.xlu0 %473
  %475 = vrot.lane.b32.xlu0 %v417, 32
  %v476 = vpop.permute.xlu0 %475
  %477 = vrot.lane.b32.xlu0 %v418, 32
  %v478 = vpop.permute.xlu0 %477
  %479 = vrot.lane.b32.xlu0 %v419, 32
  %v480 = vpop.permute.xlu0 %479
  %481 = vrot.lane.b32.xlu0 %v420, 32
  %v482 = vpop.permute.xlu0 %481
  %483 = vrot.lane.b32.xlu0 %v421, 32
  %v484 = vpop.permute.xlu0 %483
  %485 = vrot.lane.b32.xlu0 %v422, 32
  %v486 = vpop.permute.xlu0 %485
  %487 = vrot.lane.b32.xlu0 %v423, 32
  %v488 = vpop.permute.xlu0 %487
  %vm505 = vcmask 523520
  %506 = vst.msk [vmem:[%s2] sm:$0xff] %vm505, %v458
  %507 = vst.msk [vmem:[%s2 + $0x8] sm:$0xff] %vm505, %v460
  %508 = vst.msk [vmem:[%s2 + $0x10] sm:$0xff] %vm505, %v462
  %509 = vst.msk [vmem:[%s2 + $0x18] sm:$0xff] %vm505, %v464
  %510 = vst.msk [vmem:[%s2 + $0x20] sm:$0xff] %vm505, %v466
  %511 = vst.msk [vmem:[%s2 + $0x28] sm:$0xff] %vm505, %v468
  %512 = vst.msk [vmem:[%s2 + $0x30] sm:$0xff] %vm505, %v470
  %513 = vst.msk [vmem:[%s2 + $0x38] sm:$0xff] %vm505, %v472
  %514 = vst.msk [vmem:[%s2 + $0x40] sm:$0xff] %vm505, %v474
  %515 = vst.msk [vmem:[%s2 + $0x48] sm:$0xff] %vm505, %v476
  %516 = vst.msk [vmem:[%s2 + $0x50] sm:$0xff] %vm505, %v478
  %517 = vst.msk [vmem:[%s2 + $0x58] sm:$0xff] %vm505, %v480
  %518 = vst.msk [vmem:[%s2 + $0x60] sm:$0xff] %vm505, %v482
  %519 = vst.msk [vmem:[%s2 + $0x68] sm:$0xff] %vm505, %v484
  %520 = vst.msk [vmem:[%s2 + $0x70] sm:$0xff] %vm505, %v486
  %521 = vst.msk [vmem:[%s2 + $0x78] sm:$0xff] %vm505, %v488
  // Predicated region
  $region10: #{tpu_custom_call.1} parent=0 // pred_check
    _
  $region11: #{tpu_custom_call.1} parent=0 // pred_check_branch
    %523 = sbr.rel (0) target = $region13
  $region12: #{tpu_custom_call.1} parent=0 // pred_region
    _
  $region13: #{tpu_custom_call.1} parent=0 // pred_fallthru
    _
  // Predicated region
  $region14: #{tpu_custom_call.1} parent=0 // pred_check
    _
  $region15: #{tpu_custom_call.1} parent=0 // pred_check_branch
    %525 = sbr.rel (0) target = $region17
  $region16: #{tpu_custom_call.1} parent=0 // pred_region
    _
  $region17: #{tpu_custom_call.1} parent=0 // pred_fallthru
    _

</llo_original>
